<compile_context>
chip_gen: v6e
topology: v6e:2x2x1
jax: 0.10.0
libtpu: 0.0.40
codegen_flags: <defaults>
</compile_context>

<pallas_src>
import numpy as np
import jax
import jax.numpy as jnp
from jax import lax
from jax.experimental import pallas as pl
from jax.experimental.pallas import tpu as pltpu

# Synthetic circuit geometry (deterministic, stands in for qb.core ParamCirc).
N_QUBITS = 7                        # circuit.numQubits()
N_LAYERS = 2                        # variational depth
DIM = 2 ** N_QUBITS                 # out_features = 128 (one full lane axis)
IN_FEATURES = N_QUBITS              # circuit.numInputs()
NUM_WEIGHTS = N_LAYERS * N_QUBITS   # circuit.numParams()
NUM_ANGLES = IN_FEATURES + NUM_WEIGHTS  # 21 gate angles total
SUBLANES = 8                        # f32 sublane tile; psi kept (8, DIM) = 1 vreg


# ---------------------------------------------------------------------------
# Pallas kernel: gate-by-gate statevector evolution on one (8,128) vreg.
# ---------------------------------------------------------------------------
def circuit_kernel(c_ref, s_ref, out_ref):
  """Statevector simulation: Ry / CNOT applied as lane rolls + FMAs.

  c_ref, s_ref : SMEM (NUM_ANGLES,) f32 -- cos(theta/2), sin(theta/2) per gate
                 (first the 7 input-encoding angles, then L*7 weight angles).
  out_ref      : VMEM (SUBLANES, DIM) f32 -- |psi|^2, identical in every sublane.
  """
  lane = lax.broadcasted_iota(jnp.int32, (SUBLANES, DIM), 1)
  # Per-bit masks: True where basis-index bit `b` is 0.  Qubit q is the
  # most-significant kron factor, i.e. lives at bit position N_QUBITS-1-q.
  bit_is0 = [(lane & (1 << b)) == 0 for b in range(N_QUBITS)]

  # |0...0> replicated across all sublanes (no row left uninitialized).
  psi = jnp.where(lane == 0, 1.0, 0.0).astype(jnp.float32)

  def partner(v, b):
    """v[i XOR 2^b]: amplitude of the basis state with bit b flipped."""
    k = 1 << b
    up = pltpu.roll(v, DIM - k, axis=1)    # up[i]   = v[(i + k) % DIM]
    down = pltpu.roll(v, k, axis=1)        # down[i] = v[(i - k) % DIM]
    return jnp.where(bit_is0[b], up, down)

  def apply_ry(v, c, s, q):
    """Ry(theta) on qubit q: [[c,-s],[s,c]] on each (bit=0, bit=1) pair."""
    b = N_QUBITS - 1 - q
    p = partner(v, b)
    return c * v + s * jnp.where(bit_is0[b], -p, p)

  def apply_cnot(v, ctrl_q, tgt_q):
    """CNOT(ctrl -> tgt): flip the target bit where the control bit is 1."""
    cb = N_QUBITS - 1 - ctrl_q
    tb = N_QUBITS - 1 - tgt_q
    p = partner(v, tb)
    return jnp.where(bit_is0[cb], v, p)

  # Stage 0: input-encoding Ry layer applied to |0...0>.
  for q in range(N_QUBITS):
    psi = apply_ry(psi, c_ref[q], s_ref[q], q)
  # Variational layers: Ry layer + CNOT ring (q -> q+1 mod n, applied q=0..n-1).
  for l in range(N_LAYERS):
    base = N_QUBITS * (l + 1)
    for q in range(N_QUBITS):
      psi = apply_ry(psi, c_ref[base + q], s_ref[base + q], q)
    for q in range(N_QUBITS):
      psi = apply_cnot(psi, q, (q + 1) % N_QUBITS)

  # Measurement probabilities: |amplitude|^2 (all-real statevector).
  out_ref[...] = psi * psi


@jax.jit
def quantum_layer_forward(input_angles, weights):
  """Equivalent of QuantumLayer.forward(input): returns probs of shape (2**n,)."""
  angles = jnp.concatenate([input_angles.astype(jnp.float32),
                            weights.astype(jnp.float32)])
  half = 0.5 * angles
  cosines = jnp.cos(half)
  sines = jnp.sin(half)
  probs = pl.pallas_call(
      circuit_kernel,
      out_shape=jax.ShapeDtypeStruct((SUBLANES, DIM), jnp.float32),
      in_specs=[
          pl.BlockSpec(memory_space=pltpu.MemorySpace.SMEM),   # cos(theta/2)
          pl.BlockSpec(memory_space=pltpu.MemorySpace.SMEM),   # sin(theta/2)
      ],
      out_specs=pl.BlockSpec(memory_space=pltpu.MemorySpace.VMEM),
  )(cosines, sines)
  return probs[0]   # (DIM,) == (out_features,)


# ---------------------------------------------------------------------------
# Pure-JAX reference path (dense unitaries) -- used only for verification.
# ---------------------------------------------------------------------------
def _ry(theta):
  c = jnp.cos(theta / 2.0)
  s = jnp.sin(theta / 2.0)
  return jnp.stack([jnp.stack([c, -s]), jnp.stack([s, c])])


def _kron_ry_layer(angles):
  """kron(Ry(a_0), ..., Ry(a_{n-1})); qubit 0 is the most-significant bit."""
  u = jnp.ones((1, 1), dtype=jnp.float32)
  for q in range(N_QUBITS):
    u = jnp.kron(u, _ry(angles[q]))
  return u


def _cnot_ring_matrix():
  """Explicit permutation matrix of CNOT(q -> q+1 mod n) applied q = 0..n-1."""
  mapping = np.arange(DIM)
  for q in range(N_QUBITS):
    c_bit = N_QUBITS - 1 - q
    t_bit = N_QUBITS - 1 - ((q + 1) % N_QUBITS)
    ctrl = (mapping >> c_bit) & 1
    mapping = np.where(ctrl == 1, mapping ^ (1 << t_bit), mapping)
  m = np.zeros((DIM, DIM), dtype=np.float32)
  m[mapping, np.arange(DIM)] = 1.0
  return jnp.asarray(m)


if __name__ == "__main__":
  key = jax.random.PRNGKey(0)
  k_in, k_w = jax.random.split(key)
  # Layer input (what forward() receives) and the layer's trainable weights,
  # matching torch.rand initialization in __init__ (uniform [0, 1)).
  x = jax.random.uniform(k_in, (IN_FEATURES,), dtype=jnp.float32)
  weights = jax.random.uniform(k_w, (NUM_WEIGHTS,), dtype=jnp.float32)

  probs = jax.block_until_ready(quantum_layer_forward(x, weights))

  # Pure-JAX reference (full unitaries, explicit CNOT permutation matrix).
  cnot = _cnot_ring_matrix()
  w = weights.reshape(N_LAYERS, N_QUBITS)
  stages = [_kron_ry_layer(x)] + [cnot @ _kron_ry_layer(w[l])
                                  for l in range(N_LAYERS)]
  psi = jnp.zeros((DIM,), jnp.float32).at[0].set(1.0)
  for u in stages:
    psi = u @ psi
  ref = psi * psi

  assert probs.shape == (DIM,)
  assert jnp.allclose(jnp.sum(probs), 1.0, atol=1e-4)
  assert jnp.allclose(probs, ref, atol=1e-5)
  print("KERNEL_OK")
</pallas_src>

<mosaic_0001>
module attributes {stable_mosaic.version = 11 : i64} {
  func.func @circuit_kernel(%arg0: memref<21xf32, #tpu.memory_space<smem>>, %arg1: memref<21xf32, #tpu.memory_space<smem>>, %arg2: memref<8x128xf32, #tpu.memory_space<vmem>>) attributes {dimension_semantics = [], scalar_prefetch = 0 : i64, scratch_operands = 0 : i64, tpu.core_type = #tpu.core_type<tc>} {
    %0 = tpu.iota {dimensions = array<i32: 1>} : vector<8x128xi32>
    %c1_i32 = arith.constant 1 : i32
    %1 = vector.broadcast %c1_i32 : i32 to vector<8x128xi32>
    %2 = arith.andi %0, %1 : vector<8x128xi32>
    %c0_i32 = arith.constant 0 : i32
    %3 = vector.broadcast %c0_i32 : i32 to vector<8x128xi32>
    %4 = arith.cmpi eq, %2, %3 : vector<8x128xi32>
    %c2_i32 = arith.constant 2 : i32
    %5 = vector.broadcast %c2_i32 : i32 to vector<8x128xi32>
    %6 = arith.andi %0, %5 : vector<8x128xi32>
    %c0_i32_0 = arith.constant 0 : i32
    %7 = vector.broadcast %c0_i32_0 : i32 to vector<8x128xi32>
    %8 = arith.cmpi eq, %6, %7 : vector<8x128xi32>
    %c4_i32 = arith.constant 4 : i32
    %9 = vector.broadcast %c4_i32 : i32 to vector<8x128xi32>
    %10 = arith.andi %0, %9 : vector<8x128xi32>
    %c0_i32_1 = arith.constant 0 : i32
    %11 = vector.broadcast %c0_i32_1 : i32 to vector<8x128xi32>
    %12 = arith.cmpi eq, %10, %11 : vector<8x128xi32>
    %c8_i32 = arith.constant 8 : i32
    %13 = vector.broadcast %c8_i32 : i32 to vector<8x128xi32>
    %14 = arith.andi %0, %13 : vector<8x128xi32>
    %c0_i32_2 = arith.constant 0 : i32
    %15 = vector.broadcast %c0_i32_2 : i32 to vector<8x128xi32>
    %16 = arith.cmpi eq, %14, %15 : vector<8x128xi32>
    %c16_i32 = arith.constant 16 : i32
    %17 = vector.broadcast %c16_i32 : i32 to vector<8x128xi32>
    %18 = arith.andi %0, %17 : vector<8x128xi32>
    %c0_i32_3 = arith.constant 0 : i32
    %19 = vector.broadcast %c0_i32_3 : i32 to vector<8x128xi32>
    %20 = arith.cmpi eq, %18, %19 : vector<8x128xi32>
    %c32_i32 = arith.constant 32 : i32
    %21 = vector.broadcast %c32_i32 : i32 to vector<8x128xi32>
    %22 = arith.andi %0, %21 : vector<8x128xi32>
    %c0_i32_4 = arith.constant 0 : i32
    %23 = vector.broadcast %c0_i32_4 : i32 to vector<8x128xi32>
    %24 = arith.cmpi eq, %22, %23 : vector<8x128xi32>
    %c64_i32 = arith.constant 64 : i32
    %25 = vector.broadcast %c64_i32 : i32 to vector<8x128xi32>
    %26 = arith.andi %0, %25 : vector<8x128xi32>
    %c0_i32_5 = arith.constant 0 : i32
    %27 = vector.broadcast %c0_i32_5 : i32 to vector<8x128xi32>
    %28 = arith.cmpi eq, %26, %27 : vector<8x128xi32>
    %c0_i32_6 = arith.constant 0 : i32
    %29 = vector.broadcast %c0_i32_6 : i32 to vector<8x128xi32>
    %30 = arith.cmpi eq, %0, %29 : vector<8x128xi32>
    %cst = arith.constant 1.000000e+00 : f32
    %cst_7 = arith.constant 0.000000e+00 : f32
    %31 = vector.broadcast %cst : f32 to vector<8x128xf32>
    %32 = vector.broadcast %cst_7 : f32 to vector<8x128xf32>
    %33 = arith.select %30, %31, %32 : vector<8x128xi1>, vector<8x128xf32>
    %c0 = arith.constant 0 : index
    %34 = memref.load %arg0[%c0] : memref<21xf32, #tpu.memory_space<smem>>
    %c0_8 = arith.constant 0 : index
    %35 = memref.load %arg1[%c0_8] : memref<21xf32, #tpu.memory_space<smem>>
    %c64_i32_9 = arith.constant 64 : i32
    %36 = tpu.dynamic_rotate %33 by %c64_i32_9 dim 1 : vector<8x128xf32>, i32 -> vector<8x128xf32>
    %c64_i32_10 = arith.constant 64 : i32
    %37 = tpu.dynamic_rotate %33 by %c64_i32_10 dim 1 : vector<8x128xf32>, i32 -> vector<8x128xf32>
    %38 = arith.select %28, %36, %37 : vector<8x128xi1>, vector<8x128xf32>
    %39 = vector.broadcast %34 : f32 to vector<8x128xf32>
    %40 = arith.mulf %39, %33 : vector<8x128xf32>
    %cst_11 = arith.constant 0.000000e+00 : f32
    %41 = vector.broadcast %cst_11 : f32 to vector<8x128xf32>
    %42 = arith.subf %41, %38 : vector<8x128xf32>
    %43 = arith.select %28, %42, %38 : vector<8x128xi1>, vector<8x128xf32>
    %44 = vector.broadcast %35 : f32 to vector<8x128xf32>
    %45 = arith.mulf %44, %43 : vector<8x128xf32>
    %46 = arith.addf %40, %45 : vector<8x128xf32>
    %c1 = arith.constant 1 : index
    %47 = memref.load %arg0[%c1] : memref<21xf32, #tpu.memory_space<smem>>
    %c1_12 = arith.constant 1 : index
    %48 = memref.load %arg1[%c1_12] : memref<21xf32, #tpu.memory_space<smem>>
    %c96_i32 = arith.constant 96 : i32
    %49 = tpu.dynamic_rotate %46 by %c96_i32 dim 1 : vector<8x128xf32>, i32 -> vector<8x128xf32>
    %c32_i32_13 = arith.constant 32 : i32
    %50 = tpu.dynamic_rotate %46 by %c32_i32_13 dim 1 : vector<8x128xf32>, i32 -> vector<8x128xf32>
    %51 = arith.select %24, %49, %50 : vector<8x128xi1>, vector<8x128xf32>
    %52 = vector.broadcast %47 : f32 to vector<8x128xf32>
    %53 = arith.mulf %52, %46 : vector<8x128xf32>
    %cst_14 = arith.constant 0.000000e+00 : f32
    %54 = vector.broadcast %cst_14 : f32 to vector<8x128xf32>
    %55 = arith.subf %54, %51 : vector<8x128xf32>
    %56 = arith.select %24, %55, %51 : vector<8x128xi1>, vector<8x128xf32>
    %57 = vector.broadcast %48 : f32 to vector<8x128xf32>
    %58 = arith.mulf %57, %56 : vector<8x128xf32>
    %59 = arith.addf %53, %58 : vector<8x128xf32>
    %c2 = arith.constant 2 : index
    %60 = memref.load %arg0[%c2] : memref<21xf32, #tpu.memory_space<smem>>
    %c2_15 = arith.constant 2 : index
    %61 = memref.load %arg1[%c2_15] : memref<21xf32, #tpu.memory_space<smem>>
    %c112_i32 = arith.constant 112 : i32
    %62 = tpu.dynamic_rotate %59 by %c112_i32 dim 1 : vector<8x128xf32>, i32 -> vector<8x128xf32>
    %c16_i32_16 = arith.constant 16 : i32
    %63 = tpu.dynamic_rotate %59 by %c16_i32_16 dim 1 : vector<8x128xf32>, i32 -> vector<8x128xf32>
    %64 = arith.select %20, %62, %63 : vector<8x128xi1>, vector<8x128xf32>
    %65 = vector.broadcast %60 : f32 to vector<8x128xf32>
    %66 = arith.mulf %65, %59 : vector<8x128xf32>
    %cst_17 = arith.constant 0.000000e+00 : f32
    %67 = vector.broadcast %cst_17 : f32 to vector<8x128xf32>
    %68 = arith.subf %67, %64 : vector<8x128xf32>
    %69 = arith.select %20, %68, %64 : vector<8x128xi1>, vector<8x128xf32>
    %70 = vector.broadcast %61 : f32 to vector<8x128xf32>
    %71 = arith.mulf %70, %69 : vector<8x128xf32>
    %72 = arith.addf %66, %71 : vector<8x128xf32>
    %c3 = arith.constant 3 : index
    %73 = memref.load %arg0[%c3] : memref<21xf32, #tpu.memory_space<smem>>
    %c3_18 = arith.constant 3 : index
    %74 = memref.load %arg1[%c3_18] : memref<21xf32, #tpu.memory_space<smem>>
    %c120_i32 = arith.constant 120 : i32
    %75 = tpu.dynamic_rotate %72 by %c120_i32 dim 1 : vector<8x128xf32>, i32 -> vector<8x128xf32>
    %c8_i32_19 = arith.constant 8 : i32
    %76 = tpu.dynamic_rotate %72 by %c8_i32_19 dim 1 : vector<8x128xf32>, i32 -> vector<8x128xf32>
    %77 = arith.select %16, %75, %76 : vector<8x128xi1>, vector<8x128xf32>
    %78 = vector.broadcast %73 : f32 to vector<8x128xf32>
    %79 = arith.mulf %78, %72 : vector<8x128xf32>
    %cst_20 = arith.constant 0.000000e+00 : f32
    %80 = vector.broadcast %cst_20 : f32 to vector<8x128xf32>
    %81 = arith.subf %80, %77 : vector<8x128xf32>
    %82 = arith.select %16, %81, %77 : vector<8x128xi1>, vector<8x128xf32>
    %83 = vector.broadcast %74 : f32 to vector<8x128xf32>
    %84 = arith.mulf %83, %82 : vector<8x128xf32>
    %85 = arith.addf %79, %84 : vector<8x128xf32>
    %c4 = arith.constant 4 : index
    %86 = memref.load %arg0[%c4] : memref<21xf32, #tpu.memory_space<smem>>
    %c4_21 = arith.constant 4 : index
    %87 = memref.load %arg1[%c4_21] : memref<21xf32, #tpu.memory_space<smem>>
    %c124_i32 = arith.constant 124 : i32
    %88 = tpu.dynamic_rotate %85 by %c124_i32 dim 1 : vector<8x128xf32>, i32 -> vector<8x128xf32>
    %c4_i32_22 = arith.constant 4 : i32
    %89 = tpu.dynamic_rotate %85 by %c4_i32_22 dim 1 : vector<8x128xf32>, i32 -> vector<8x128xf32>
    %90 = arith.select %12, %88, %89 : vector<8x128xi1>, vector<8x128xf32>
    %91 = vector.broadcast %86 : f32 to vector<8x128xf32>
    %92 = arith.mulf %91, %85 : vector<8x128xf32>
    %cst_23 = arith.constant 0.000000e+00 : f32
    %93 = vector.broadcast %cst_23 : f32 to vector<8x128xf32>
    %94 = arith.subf %93, %90 : vector<8x128xf32>
    %95 = arith.select %12, %94, %90 : vector<8x128xi1>, vector<8x128xf32>
    %96 = vector.broadcast %87 : f32 to vector<8x128xf32>
    %97 = arith.mulf %96, %95 : vector<8x128xf32>
    %98 = arith.addf %92, %97 : vector<8x128xf32>
    %c5 = arith.constant 5 : index
    %99 = memref.load %arg0[%c5] : memref<21xf32, #tpu.memory_space<smem>>
    %c5_24 = arith.constant 5 : index
    %100 = memref.load %arg1[%c5_24] : memref<21xf32, #tpu.memory_space<smem>>
    %c126_i32 = arith.constant 126 : i32
    %101 = tpu.dynamic_rotate %98 by %c126_i32 dim 1 : vector<8x128xf32>, i32 -> vector<8x128xf32>
    %c2_i32_25 = arith.constant 2 : i32
    %102 = tpu.dynamic_rotate %98 by %c2_i32_25 dim 1 : vector<8x128xf32>, i32 -> vector<8x128xf32>
    %103 = arith.select %8, %101, %102 : vector<8x128xi1>, vector<8x128xf32>
    %104 = vector.broadcast %99 : f32 to vector<8x128xf32>
    %105 = arith.mulf %104, %98 : vector<8x128xf32>
    %cst_26 = arith.constant 0.000000e+00 : f32
    %106 = vector.broadcast %cst_26 : f32 to vector<8x128xf32>
    %107 = arith.subf %106, %103 : vector<8x128xf32>
    %108 = arith.select %8, %107, %103 : vector<8x128xi1>, vector<8x128xf32>
    %109 = vector.broadcast %100 : f32 to vector<8x128xf32>
    %110 = arith.mulf %109, %108 : vector<8x128xf32>
    %111 = arith.addf %105, %110 : vector<8x128xf32>
    %c6 = arith.constant 6 : index
    %112 = memref.load %arg0[%c6] : memref<21xf32, #tpu.memory_space<smem>>
    %c6_27 = arith.constant 6 : index
    %113 = memref.load %arg1[%c6_27] : memref<21xf32, #tpu.memory_space<smem>>
    %c127_i32 = arith.constant 127 : i32
    %114 = tpu.dynamic_rotate %111 by %c127_i32 dim 1 : vector<8x128xf32>, i32 -> vector<8x128xf32>
    %c1_i32_28 = arith.constant 1 : i32
    %115 = tpu.dynamic_rotate %111 by %c1_i32_28 dim 1 : vector<8x128xf32>, i32 -> vector<8x128xf32>
    %116 = arith.select %4, %114, %115 : vector<8x128xi1>, vector<8x128xf32>
    %117 = vector.broadcast %112 : f32 to vector<8x128xf32>
    %118 = arith.mulf %117, %111 : vector<8x128xf32>
    %cst_29 = arith.constant 0.000000e+00 : f32
    %119 = vector.broadcast %cst_29 : f32 to vector<8x128xf32>
    %120 = arith.subf %119, %116 : vector<8x128xf32>
    %121 = arith.select %4, %120, %116 : vector<8x128xi1>, vector<8x128xf32>
    %122 = vector.broadcast %113 : f32 to vector<8x128xf32>
    %123 = arith.mulf %122, %121 : vector<8x128xf32>
    %124 = arith.addf %118, %123 : vector<8x128xf32>
    %c7 = arith.constant 7 : index
    %125 = memref.load %arg0[%c7] : memref<21xf32, #tpu.memory_space<smem>>
    %c7_30 = arith.constant 7 : index
    %126 = memref.load %arg1[%c7_30] : memref<21xf32, #tpu.memory_space<smem>>
    %c64_i32_31 = arith.constant 64 : i32
    %127 = tpu.dynamic_rotate %124 by %c64_i32_31 dim 1 : vector<8x128xf32>, i32 -> vector<8x128xf32>
    %c64_i32_32 = arith.constant 64 : i32
    %128 = tpu.dynamic_rotate %124 by %c64_i32_32 dim 1 : vector<8x128xf32>, i32 -> vector<8x128xf32>
    %129 = arith.select %28, %127, %128 : vector<8x128xi1>, vector<8x128xf32>
    %130 = vector.broadcast %125 : f32 to vector<8x128xf32>
    %131 = arith.mulf %130, %124 : vector<8x128xf32>
    %cst_33 = arith.constant 0.000000e+00 : f32
    %132 = vector.broadcast %cst_33 : f32 to vector<8x128xf32>
    %133 = arith.subf %132, %129 : vector<8x128xf32>
    %134 = arith.select %28, %133, %129 : vector<8x128xi1>, vector<8x128xf32>
    %135 = vector.broadcast %126 : f32 to vector<8x128xf32>
    %136 = arith.mulf %135, %134 : vector<8x128xf32>
    %137 = arith.addf %131, %136 : vector<8x128xf32>
    %c8 = arith.constant 8 : index
    %138 = memref.load %arg0[%c8] : memref<21xf32, #tpu.memory_space<smem>>
    %c8_34 = arith.constant 8 : index
    %139 = memref.load %arg1[%c8_34] : memref<21xf32, #tpu.memory_space<smem>>
    %c96_i32_35 = arith.constant 96 : i32
    %140 = tpu.dynamic_rotate %137 by %c96_i32_35 dim 1 : vector<8x128xf32>, i32 -> vector<8x128xf32>
    %c32_i32_36 = arith.constant 32 : i32
    %141 = tpu.dynamic_rotate %137 by %c32_i32_36 dim 1 : vector<8x128xf32>, i32 -> vector<8x128xf32>
    %142 = arith.select %24, %140, %141 : vector<8x128xi1>, vector<8x128xf32>
    %143 = vector.broadcast %138 : f32 to vector<8x128xf32>
    %144 = arith.mulf %143, %137 : vector<8x128xf32>
    %cst_37 = arith.constant 0.000000e+00 : f32
    %145 = vector.broadcast %cst_37 : f32 to vector<8x128xf32>
    %146 = arith.subf %145, %142 : vector<8x128xf32>
    %147 = arith.select %24, %146, %142 : vector<8x128xi1>, vector<8x128xf32>
    %148 = vector.broadcast %139 : f32 to vector<8x128xf32>
    %149 = arith.mulf %148, %147 : vector<8x128xf32>
    %150 = arith.addf %144, %149 : vector<8x128xf32>
    %c9 = arith.constant 9 : index
    %151 = memref.load %arg0[%c9] : memref<21xf32, #tpu.memory_space<smem>>
    %c9_38 = arith.constant 9 : index
    %152 = memref.load %arg1[%c9_38] : memref<21xf32, #tpu.memory_space<smem>>
    %c112_i32_39 = arith.constant 112 : i32
    %153 = tpu.dynamic_rotate %150 by %c112_i32_39 dim 1 : vector<8x128xf32>, i32 -> vector<8x128xf32>
    %c16_i32_40 = arith.constant 16 : i32
    %154 = tpu.dynamic_rotate %150 by %c16_i32_40 dim 1 : vector<8x128xf32>, i32 -> vector<8x128xf32>
    %155 = arith.select %20, %153, %154 : vector<8x128xi1>, vector<8x128xf32>
    %156 = vector.broadcast %151 : f32 to vector<8x128xf32>
    %157 = arith.mulf %156, %150 : vector<8x128xf32>
    %cst_41 = arith.constant 0.000000e+00 : f32
    %158 = vector.broadcast %cst_41 : f32 to vector<8x128xf32>
    %159 = arith.subf %158, %155 : vector<8x128xf32>
    %160 = arith.select %20, %159, %155 : vector<8x128xi1>, vector<8x128xf32>
    %161 = vector.broadcast %152 : f32 to vector<8x128xf32>
    %162 = arith.mulf %161, %160 : vector<8x128xf32>
    %163 = arith.addf %157, %162 : vector<8x128xf32>
    %c10 = arith.constant 10 : index
    %164 = memref.load %arg0[%c10] : memref<21xf32, #tpu.memory_space<smem>>
    %c10_42 = arith.constant 10 : index
    %165 = memref.load %arg1[%c10_42] : memref<21xf32, #tpu.memory_space<smem>>
    %c120_i32_43 = arith.constant 120 : i32
    %166 = tpu.dynamic_rotate %163 by %c120_i32_43 dim 1 : vector<8x128xf32>, i32 -> vector<8x128xf32>
    %c8_i32_44 = arith.constant 8 : i32
    %167 = tpu.dynamic_rotate %163 by %c8_i32_44 dim 1 : vector<8x128xf32>, i32 -> vector<8x128xf32>
    %168 = arith.select %16, %166, %167 : vector<8x128xi1>, vector<8x128xf32>
    %169 = vector.broadcast %164 : f32 to vector<8x128xf32>
    %170 = arith.mulf %169, %163 : vector<8x128xf32>
    %cst_45 = arith.constant 0.000000e+00 : f32
    %171 = vector.broadcast %cst_45 : f32 to vector<8x128xf32>
    %172 = arith.subf %171, %168 : vector<8x128xf32>
    %173 = arith.select %16, %172, %168 : vector<8x128xi1>, vector<8x128xf32>
    %174 = vector.broadcast %165 : f32 to vector<8x128xf32>
    %175 = arith.mulf %174, %173 : vector<8x128xf32>
    %176 = arith.addf %170, %175 : vector<8x128xf32>
    %c11 = arith.constant 11 : index
    %177 = memref.load %arg0[%c11] : memref<21xf32, #tpu.memory_space<smem>>
    %c11_46 = arith.constant 11 : index
    %178 = memref.load %arg1[%c11_46] : memref<21xf32, #tpu.memory_space<smem>>
    %c124_i32_47 = arith.constant 124 : i32
    %179 = tpu.dynamic_rotate %176 by %c124_i32_47 dim 1 : vector<8x128xf32>, i32 -> vector<8x128xf32>
    %c4_i32_48 = arith.constant 4 : i32
    %180 = tpu.dynamic_rotate %176 by %c4_i32_48 dim 1 : vector<8x128xf32>, i32 -> vector<8x128xf32>
    %181 = arith.select %12, %179, %180 : vector<8x128xi1>, vector<8x128xf32>
    %182 = vector.broadcast %177 : f32 to vector<8x128xf32>
    %183 = arith.mulf %182, %176 : vector<8x128xf32>
    %cst_49 = arith.constant 0.000000e+00 : f32
    %184 = vector.broadcast %cst_49 : f32 to vector<8x128xf32>
    %185 = arith.subf %184, %181 : vector<8x128xf32>
    %186 = arith.select %12, %185, %181 : vector<8x128xi1>, vector<8x128xf32>
    %187 = vector.broadcast %178 : f32 to vector<8x128xf32>
    %188 = arith.mulf %187, %186 : vector<8x128xf32>
    %189 = arith.addf %183, %188 : vector<8x128xf32>
    %c12 = arith.constant 12 : index
    %190 = memref.load %arg0[%c12] : memref<21xf32, #tpu.memory_space<smem>>
    %c12_50 = arith.constant 12 : index
    %191 = memref.load %arg1[%c12_50] : memref<21xf32, #tpu.memory_space<smem>>
    %c126_i32_51 = arith.constant 126 : i32
    %192 = tpu.dynamic_rotate %189 by %c126_i32_51 dim 1 : vector<8x128xf32>, i32 -> vector<8x128xf32>
    %c2_i32_52 = arith.constant 2 : i32
    %193 = tpu.dynamic_rotate %189 by %c2_i32_52 dim 1 : vector<8x128xf32>, i32 -> vector<8x128xf32>
    %194 = arith.select %8, %192, %193 : vector<8x128xi1>, vector<8x128xf32>
    %195 = vector.broadcast %190 : f32 to vector<8x128xf32>
    %196 = arith.mulf %195, %189 : vector<8x128xf32>
    %cst_53 = arith.constant 0.000000e+00 : f32
    %197 = vector.broadcast %cst_53 : f32 to vector<8x128xf32>
    %198 = arith.subf %197, %194 : vector<8x128xf32>
    %199 = arith.select %8, %198, %194 : vector<8x128xi1>, vector<8x128xf32>
    %200 = vector.broadcast %191 : f32 to vector<8x128xf32>
    %201 = arith.mulf %200, %199 : vector<8x128xf32>
    %202 = arith.addf %196, %201 : vector<8x128xf32>
    %c13 = arith.constant 13 : index
    %203 = memref.load %arg0[%c13] : memref<21xf32, #tpu.memory_space<smem>>
    %c13_54 = arith.constant 13 : index
    %204 = memref.load %arg1[%c13_54] : memref<21xf32, #tpu.memory_space<smem>>
    %c127_i32_55 = arith.constant 127 : i32
    %205 = tpu.dynamic_rotate %202 by %c127_i32_55 dim 1 : vector<8x128xf32>, i32 -> vector<8x128xf32>
    %c1_i32_56 = arith.constant 1 : i32
    %206 = tpu.dynamic_rotate %202 by %c1_i32_56 dim 1 : vector<8x128xf32>, i32 -> vector<8x128xf32>
    %207 = arith.select %4, %205, %206 : vector<8x128xi1>, vector<8x128xf32>
    %208 = vector.broadcast %203 : f32 to vector<8x128xf32>
    %209 = arith.mulf %208, %202 : vector<8x128xf32>
    %cst_57 = arith.constant 0.000000e+00 : f32
    %210 = vector.broadcast %cst_57 : f32 to vector<8x128xf32>
    %211 = arith.subf %210, %207 : vector<8x128xf32>
    %212 = arith.select %4, %211, %207 : vector<8x128xi1>, vector<8x128xf32>
    %213 = vector.broadcast %204 : f32 to vector<8x128xf32>
    %214 = arith.mulf %213, %212 : vector<8x128xf32>
    %215 = arith.addf %209, %214 : vector<8x128xf32>
    %c96_i32_58 = arith.constant 96 : i32
    %216 = tpu.dynamic_rotate %215 by %c96_i32_58 dim 1 : vector<8x128xf32>, i32 -> vector<8x128xf32>
    %c32_i32_59 = arith.constant 32 : i32
    %217 = tpu.dynamic_rotate %215 by %c32_i32_59 dim 1 : vector<8x128xf32>, i32 -> vector<8x128xf32>
    %218 = arith.select %24, %216, %217 : vector<8x128xi1>, vector<8x128xf32>
    %219 = arith.select %28, %215, %218 : vector<8x128xi1>, vector<8x128xf32>
    %c112_i32_60 = arith.constant 112 : i32
    %220 = tpu.dynamic_rotate %219 by %c112_i32_60 dim 1 : vector<8x128xf32>, i32 -> vector<8x128xf32>
    %c16_i32_61 = arith.constant 16 : i32
    %221 = tpu.dynamic_rotate %219 by %c16_i32_61 dim 1 : vector<8x128xf32>, i32 -> vector<8x128xf32>
    %222 = arith.select %20, %220, %221 : vector<8x128xi1>, vector<8x128xf32>
    %223 = arith.select %24, %219, %222 : vector<8x128xi1>, vector<8x128xf32>
    %c120_i32_62 = arith.constant 120 : i32
    %224 = tpu.dynamic_rotate %223 by %c120_i32_62 dim 1 : vector<8x128xf32>, i32 -> vector<8x128xf32>
    %c8_i32_63 = arith.constant 8 : i32
    %225 = tpu.dynamic_rotate %223 by %c8_i32_63 dim 1 : vector<8x128xf32>, i32 -> vector<8x128xf32>
    %226 = arith.select %16, %224, %225 : vector<8x128xi1>, vector<8x128xf32>
    %227 = arith.select %20, %223, %226 : vector<8x128xi1>, vector<8x128xf32>
    %c124_i32_64 = arith.constant 124 : i32
    %228 = tpu.dynamic_rotate %227 by %c124_i32_64 dim 1 : vector<8x128xf32>, i32 -> vector<8x128xf32>
    %c4_i32_65 = arith.constant 4 : i32
    %229 = tpu.dynamic_rotate %227 by %c4_i32_65 dim 1 : vector<8x128xf32>, i32 -> vector<8x128xf32>
    %230 = arith.select %12, %228, %229 : vector<8x128xi1>, vector<8x128xf32>
    %231 = arith.select %16, %227, %230 : vector<8x128xi1>, vector<8x128xf32>
    %c126_i32_66 = arith.constant 126 : i32
    %232 = tpu.dynamic_rotate %231 by %c126_i32_66 dim 1 : vector<8x128xf32>, i32 -> vector<8x128xf32>
    %c2_i32_67 = arith.constant 2 : i32
    %233 = tpu.dynamic_rotate %231 by %c2_i32_67 dim 1 : vector<8x128xf32>, i32 -> vector<8x128xf32>
    %234 = arith.select %8, %232, %233 : vector<8x128xi1>, vector<8x128xf32>
    %235 = arith.select %12, %231, %234 : vector<8x128xi1>, vector<8x128xf32>
    %c127_i32_68 = arith.constant 127 : i32
    %236 = tpu.dynamic_rotate %235 by %c127_i32_68 dim 1 : vector<8x128xf32>, i32 -> vector<8x128xf32>
    %c1_i32_69 = arith.constant 1 : i32
    %237 = tpu.dynamic_rotate %235 by %c1_i32_69 dim 1 : vector<8x128xf32>, i32 -> vector<8x128xf32>
    %238 = arith.select %4, %236, %237 : vector<8x128xi1>, vector<8x128xf32>
    %239 = arith.select %8, %235, %238 : vector<8x128xi1>, vector<8x128xf32>
    %c64_i32_70 = arith.constant 64 : i32
    %240 = tpu.dynamic_rotate %239 by %c64_i32_70 dim 1 : vector<8x128xf32>, i32 -> vector<8x128xf32>
    %c64_i32_71 = arith.constant 64 : i32
    %241 = tpu.dynamic_rotate %239 by %c64_i32_71 dim 1 : vector<8x128xf32>, i32 -> vector<8x128xf32>
    %242 = arith.select %28, %240, %241 : vector<8x128xi1>, vector<8x128xf32>
    %243 = arith.select %4, %239, %242 : vector<8x128xi1>, vector<8x128xf32>
    %c14 = arith.constant 14 : index
    %244 = memref.load %arg0[%c14] : memref<21xf32, #tpu.memory_space<smem>>
    %c14_72 = arith.constant 14 : index
    %245 = memref.load %arg1[%c14_72] : memref<21xf32, #tpu.memory_space<smem>>
    %c64_i32_73 = arith.constant 64 : i32
    %246 = tpu.dynamic_rotate %243 by %c64_i32_73 dim 1 : vector<8x128xf32>, i32 -> vector<8x128xf32>
    %c64_i32_74 = arith.constant 64 : i32
    %247 = tpu.dynamic_rotate %243 by %c64_i32_74 dim 1 : vector<8x128xf32>, i32 -> vector<8x128xf32>
    %248 = arith.select %28, %246, %247 : vector<8x128xi1>, vector<8x128xf32>
    %249 = vector.broadcast %244 : f32 to vector<8x128xf32>
    %250 = arith.mulf %249, %243 : vector<8x128xf32>
    %cst_75 = arith.constant 0.000000e+00 : f32
    %251 = vector.broadcast %cst_75 : f32 to vector<8x128xf32>
    %252 = arith.subf %251, %248 : vector<8x128xf32>
    %253 = arith.select %28, %252, %248 : vector<8x128xi1>, vector<8x128xf32>
    %254 = vector.broadcast %245 : f32 to vector<8x128xf32>
    %255 = arith.mulf %254, %253 : vector<8x128xf32>
    %256 = arith.addf %250, %255 : vector<8x128xf32>
    %c15 = arith.constant 15 : index
    %257 = memref.load %arg0[%c15] : memref<21xf32, #tpu.memory_space<smem>>
    %c15_76 = arith.constant 15 : index
    %258 = memref.load %arg1[%c15_76] : memref<21xf32, #tpu.memory_space<smem>>
    %c96_i32_77 = arith.constant 96 : i32
    %259 = tpu.dynamic_rotate %256 by %c96_i32_77 dim 1 : vector<8x128xf32>, i32 -> vector<8x128xf32>
    %c32_i32_78 = arith.constant 32 : i32
    %260 = tpu.dynamic_rotate %256 by %c32_i32_78 dim 1 : vector<8x128xf32>, i32 -> vector<8x128xf32>
    %261 = arith.select %24, %259, %260 : vector<8x128xi1>, vector<8x128xf32>
    %262 = vector.broadcast %257 : f32 to vector<8x128xf32>
    %263 = arith.mulf %262, %256 : vector<8x128xf32>
    %cst_79 = arith.constant 0.000000e+00 : f32
    %264 = vector.broadcast %cst_79 : f32 to vector<8x128xf32>
    %265 = arith.subf %264, %261 : vector<8x128xf32>
    %266 = arith.select %24, %265, %261 : vector<8x128xi1>, vector<8x128xf32>
    %267 = vector.broadcast %258 : f32 to vector<8x128xf32>
    %268 = arith.mulf %267, %266 : vector<8x128xf32>
    %269 = arith.addf %263, %268 : vector<8x128xf32>
    %c16 = arith.constant 16 : index
    %270 = memref.load %arg0[%c16] : memref<21xf32, #tpu.memory_space<smem>>
    %c16_80 = arith.constant 16 : index
    %271 = memref.load %arg1[%c16_80] : memref<21xf32, #tpu.memory_space<smem>>
    %c112_i32_81 = arith.constant 112 : i32
    %272 = tpu.dynamic_rotate %269 by %c112_i32_81 dim 1 : vector<8x128xf32>, i32 -> vector<8x128xf32>
    %c16_i32_82 = arith.constant 16 : i32
    %273 = tpu.dynamic_rotate %269 by %c16_i32_82 dim 1 : vector<8x128xf32>, i32 -> vector<8x128xf32>
    %274 = arith.select %20, %272, %273 : vector<8x128xi1>, vector<8x128xf32>
    %275 = vector.broadcast %270 : f32 to vector<8x128xf32>
    %276 = arith.mulf %275, %269 : vector<8x128xf32>
    %cst_83 = arith.constant 0.000000e+00 : f32
    %277 = vector.broadcast %cst_83 : f32 to vector<8x128xf32>
    %278 = arith.subf %277, %274 : vector<8x128xf32>
    %279 = arith.select %20, %278, %274 : vector<8x128xi1>, vector<8x128xf32>
    %280 = vector.broadcast %271 : f32 to vector<8x128xf32>
    %281 = arith.mulf %280, %279 : vector<8x128xf32>
    %282 = arith.addf %276, %281 : vector<8x128xf32>
    %c17 = arith.constant 17 : index
    %283 = memref.load %arg0[%c17] : memref<21xf32, #tpu.memory_space<smem>>
    %c17_84 = arith.constant 17 : index
    %284 = memref.load %arg1[%c17_84] : memref<21xf32, #tpu.memory_space<smem>>
    %c120_i32_85 = arith.constant 120 : i32
    %285 = tpu.dynamic_rotate %282 by %c120_i32_85 dim 1 : vector<8x128xf32>, i32 -> vector<8x128xf32>
    %c8_i32_86 = arith.constant 8 : i32
    %286 = tpu.dynamic_rotate %282 by %c8_i32_86 dim 1 : vector<8x128xf32>, i32 -> vector<8x128xf32>
    %287 = arith.select %16, %285, %286 : vector<8x128xi1>, vector<8x128xf32>
    %288 = vector.broadcast %283 : f32 to vector<8x128xf32>
    %289 = arith.mulf %288, %282 : vector<8x128xf32>
    %cst_87 = arith.constant 0.000000e+00 : f32
    %290 = vector.broadcast %cst_87 : f32 to vector<8x128xf32>
    %291 = arith.subf %290, %287 : vector<8x128xf32>
    %292 = arith.select %16, %291, %287 : vector<8x128xi1>, vector<8x128xf32>
    %293 = vector.broadcast %284 : f32 to vector<8x128xf32>
    %294 = arith.mulf %293, %292 : vector<8x128xf32>
    %295 = arith.addf %289, %294 : vector<8x128xf32>
    %c18 = arith.constant 18 : index
    %296 = memref.load %arg0[%c18] : memref<21xf32, #tpu.memory_space<smem>>
    %c18_88 = arith.constant 18 : index
    %297 = memref.load %arg1[%c18_88] : memref<21xf32, #tpu.memory_space<smem>>
    %c124_i32_89 = arith.constant 124 : i32
    %298 = tpu.dynamic_rotate %295 by %c124_i32_89 dim 1 : vector<8x128xf32>, i32 -> vector<8x128xf32>
    %c4_i32_90 = arith.constant 4 : i32
    %299 = tpu.dynamic_rotate %295 by %c4_i32_90 dim 1 : vector<8x128xf32>, i32 -> vector<8x128xf32>
    %300 = arith.select %12, %298, %299 : vector<8x128xi1>, vector<8x128xf32>
    %301 = vector.broadcast %296 : f32 to vector<8x128xf32>
    %302 = arith.mulf %301, %295 : vector<8x128xf32>
    %cst_91 = arith.constant 0.000000e+00 : f32
    %303 = vector.broadcast %cst_91 : f32 to vector<8x128xf32>
    %304 = arith.subf %303, %300 : vector<8x128xf32>
    %305 = arith.select %12, %304, %300 : vector<8x128xi1>, vector<8x128xf32>
    %306 = vector.broadcast %297 : f32 to vector<8x128xf32>
    %307 = arith.mulf %306, %305 : vector<8x128xf32>
    %308 = arith.addf %302, %307 : vector<8x128xf32>
    %c19 = arith.constant 19 : index
    %309 = memref.load %arg0[%c19] : memref<21xf32, #tpu.memory_space<smem>>
    %c19_92 = arith.constant 19 : index
    %310 = memref.load %arg1[%c19_92] : memref<21xf32, #tpu.memory_space<smem>>
    %c126_i32_93 = arith.constant 126 : i32
    %311 = tpu.dynamic_rotate %308 by %c126_i32_93 dim 1 : vector<8x128xf32>, i32 -> vector<8x128xf32>
    %c2_i32_94 = arith.constant 2 : i32
    %312 = tpu.dynamic_rotate %308 by %c2_i32_94 dim 1 : vector<8x128xf32>, i32 -> vector<8x128xf32>
    %313 = arith.select %8, %311, %312 : vector<8x128xi1>, vector<8x128xf32>
    %314 = vector.broadcast %309 : f32 to vector<8x128xf32>
    %315 = arith.mulf %314, %308 : vector<8x128xf32>
    %cst_95 = arith.constant 0.000000e+00 : f32
    %316 = vector.broadcast %cst_95 : f32 to vector<8x128xf32>
    %317 = arith.subf %316, %313 : vector<8x128xf32>
    %318 = arith.select %8, %317, %313 : vector<8x128xi1>, vector<8x128xf32>
    %319 = vector.broadcast %310 : f32 to vector<8x128xf32>
    %320 = arith.mulf %319, %318 : vector<8x128xf32>
    %321 = arith.addf %315, %320 : vector<8x128xf32>
    %c20 = arith.constant 20 : index
    %322 = memref.load %arg0[%c20] : memref<21xf32, #tpu.memory_space<smem>>
    %c20_96 = arith.constant 20 : index
    %323 = memref.load %arg1[%c20_96] : memref<21xf32, #tpu.memory_space<smem>>
    %c127_i32_97 = arith.constant 127 : i32
    %324 = tpu.dynamic_rotate %321 by %c127_i32_97 dim 1 : vector<8x128xf32>, i32 -> vector<8x128xf32>
    %c1_i32_98 = arith.constant 1 : i32
    %325 = tpu.dynamic_rotate %321 by %c1_i32_98 dim 1 : vector<8x128xf32>, i32 -> vector<8x128xf32>
    %326 = arith.select %4, %324, %325 : vector<8x128xi1>, vector<8x128xf32>
    %327 = vector.broadcast %322 : f32 to vector<8x128xf32>
    %328 = arith.mulf %327, %321 : vector<8x128xf32>
    %cst_99 = arith.constant 0.000000e+00 : f32
    %329 = vector.broadcast %cst_99 : f32 to vector<8x128xf32>
    %330 = arith.subf %329, %326 : vector<8x128xf32>
    %331 = arith.select %4, %330, %326 : vector<8x128xi1>, vector<8x128xf32>
    %332 = vector.broadcast %323 : f32 to vector<8x128xf32>
    %333 = arith.mulf %332, %331 : vector<8x128xf32>
    %334 = arith.addf %328, %333 : vector<8x128xf32>
    %c96_i32_100 = arith.constant 96 : i32
    %335 = tpu.dynamic_rotate %334 by %c96_i32_100 dim 1 : vector<8x128xf32>, i32 -> vector<8x128xf32>
    %c32_i32_101 = arith.constant 32 : i32
    %336 = tpu.dynamic_rotate %334 by %c32_i32_101 dim 1 : vector<8x128xf32>, i32 -> vector<8x128xf32>
    %337 = arith.select %24, %335, %336 : vector<8x128xi1>, vector<8x128xf32>
    %338 = arith.select %28, %334, %337 : vector<8x128xi1>, vector<8x128xf32>
    %c112_i32_102 = arith.constant 112 : i32
    %339 = tpu.dynamic_rotate %338 by %c112_i32_102 dim 1 : vector<8x128xf32>, i32 -> vector<8x128xf32>
    %c16_i32_103 = arith.constant 16 : i32
    %340 = tpu.dynamic_rotate %338 by %c16_i32_103 dim 1 : vector<8x128xf32>, i32 -> vector<8x128xf32>
    %341 = arith.select %20, %339, %340 : vector<8x128xi1>, vector<8x128xf32>
    %342 = arith.select %24, %338, %341 : vector<8x128xi1>, vector<8x128xf32>
    %c120_i32_104 = arith.constant 120 : i32
    %343 = tpu.dynamic_rotate %342 by %c120_i32_104 dim 1 : vector<8x128xf32>, i32 -> vector<8x128xf32>
    %c8_i32_105 = arith.constant 8 : i32
    %344 = tpu.dynamic_rotate %342 by %c8_i32_105 dim 1 : vector<8x128xf32>, i32 -> vector<8x128xf32>
    %345 = arith.select %16, %343, %344 : vector<8x128xi1>, vector<8x128xf32>
    %346 = arith.select %20, %342, %345 : vector<8x128xi1>, vector<8x128xf32>
    %c124_i32_106 = arith.constant 124 : i32
    %347 = tpu.dynamic_rotate %346 by %c124_i32_106 dim 1 : vector<8x128xf32>, i32 -> vector<8x128xf32>
    %c4_i32_107 = arith.constant 4 : i32
    %348 = tpu.dynamic_rotate %346 by %c4_i32_107 dim 1 : vector<8x128xf32>, i32 -> vector<8x128xf32>
    %349 = arith.select %12, %347, %348 : vector<8x128xi1>, vector<8x128xf32>
    %350 = arith.select %16, %346, %349 : vector<8x128xi1>, vector<8x128xf32>
    %c126_i32_108 = arith.constant 126 : i32
    %351 = tpu.dynamic_rotate %350 by %c126_i32_108 dim 1 : vector<8x128xf32>, i32 -> vector<8x128xf32>
    %c2_i32_109 = arith.constant 2 : i32
    %352 = tpu.dynamic_rotate %350 by %c2_i32_109 dim 1 : vector<8x128xf32>, i32 -> vector<8x128xf32>
    %353 = arith.select %8, %351, %352 : vector<8x128xi1>, vector<8x128xf32>
    %354 = arith.select %12, %350, %353 : vector<8x128xi1>, vector<8x128xf32>
    %c127_i32_110 = arith.constant 127 : i32
    %355 = tpu.dynamic_rotate %354 by %c127_i32_110 dim 1 : vector<8x128xf32>, i32 -> vector<8x128xf32>
    %c1_i32_111 = arith.constant 1 : i32
    %356 = tpu.dynamic_rotate %354 by %c1_i32_111 dim 1 : vector<8x128xf32>, i32 -> vector<8x128xf32>
    %357 = arith.select %4, %355, %356 : vector<8x128xi1>, vector<8x128xf32>
    %358 = arith.select %8, %354, %357 : vector<8x128xi1>, vector<8x128xf32>
    %c64_i32_112 = arith.constant 64 : i32
    %359 = tpu.dynamic_rotate %358 by %c64_i32_112 dim 1 : vector<8x128xf32>, i32 -> vector<8x128xf32>
    %c64_i32_113 = arith.constant 64 : i32
    %360 = tpu.dynamic_rotate %358 by %c64_i32_113 dim 1 : vector<8x128xf32>, i32 -> vector<8x128xf32>
    %361 = arith.select %28, %359, %360 : vector<8x128xi1>, vector<8x128xf32>
    %362 = arith.select %4, %358, %361 : vector<8x128xi1>, vector<8x128xf32>
    %363 = arith.mulf %362, %362 : vector<8x128xf32>
    %c0_114 = arith.constant 0 : index
    %c0_115 = arith.constant 0 : index
    %364 = vector.load %arg2[%c0_114, %c0_115] : memref<8x128xf32, #tpu.memory_space<vmem>>, vector<8x128xf32>
    tpu.vector_store %arg2[%c0_114, %c0_115], %363 {strides = array<i32>} : memref<8x128xf32, #tpu.memory_space<vmem>>, vector<8x128xf32>,
    return
  }
}

</mosaic_0001>

<llo_original>
// kernel: quantum_layer_forward.1
$region0: #{quantum_layer_forward.1}
  #allocation0 [shape = 'u32[]', space=smem, size = 0x4, offset = 0x4, fixed_abs, tag = 'smem constant byte address 0x4 - core index']
  #allocation1 [shape = 'u32[144,128]{1,0:T(1,128)}', space=vmem, size = 0x12000, scoped, tag = 'internal scratch']
  %s0 = inlined_call_operand.vmem [shape: f32[21], index: 0, kind: input, shape index: {}]
  %s1 = inlined_call_operand.vmem [shape: f32[21], index: 1, kind: input, shape index: {}]
  %s2 = inlined_call_operand.vmem [shape: f32[8,128], index: 2, kind: output, shape index: {}]
  %s3 = sld [smem:[#allocation0]]
  $region26: #{quantum_layer_forward.1} parent=0
    _
  %s5 = ssub.s32 1, %s3
  %s6 = scalar_select 0, %s5, %s3
  $region1: #{quantum_layer_forward.1} parent=0
    #allocation2 [shape = 'u8[512]{0}', space=smem, size = 0x200, scoped, tag = 'input window, operand 0, single buffered']
    #allocation3 [shape = 's32[1]{0}', space=sflag, size = 0x4, scoped, tag = 'scoped memory for quantum_layer_forward.1']
    #allocation4 [shape = 'u8[512]{0}', space=smem, size = 0x200, scoped, tag = 'input window, operand 1, single buffered']
    #allocation5 [shape = 's32[1]{0}', space=sflag, size = 0x4, scoped, tag = 'scoped memory for quantum_layer_forward.1']
    %7 = vsyncpa [#allocation3], 0
    %8 = vsyncpa [#allocation5], 0
    // Predicated region
    $region2: #{quantum_layer_forward.1} parent=1 // pred_check
      _
    $region3: #{quantum_layer_forward.1} parent=1 // pred_check_branch
      %10 = sbr.rel (0) target = $region5
    $region4: #{quantum_layer_forward.1} parent=1 // pred_region
      %s12 = ssub.s32 16, 16
      %13 = vsyncadd [#allocation3], %s12
      %s15 = sshll.u32 %s0, 4
      %s16 = int_to_ptr.vmem [resolvable:$true] %s15
      %18 = dma.vmem_to_smem %s16, 16, [#allocation2], [#allocation3]
    $region5: #{quantum_layer_forward.1} parent=1 // pred_fallthru
      _
    // Predicated region
    $region6: #{quantum_layer_forward.1} parent=1 // pred_check
      _
    $region7: #{quantum_layer_forward.1} parent=1 // pred_check_branch
      %20 = sbr.rel (0) target = $region9
    $region8: #{quantum_layer_forward.1} parent=1 // pred_region
      %s22 = ssub.s32 16, 16
      %23 = vsyncadd [#allocation5], %s22
      %s25 = sshll.u32 %s1, 4
      %s26 = int_to_ptr.vmem [resolvable:$true] %s25
      %28 = dma.vmem_to_smem %s26, 16, [#allocation4], [#allocation5]
    $region9: #{quantum_layer_forward.1} parent=1 // pred_fallthru
      _
    // Predicated region
    $region10: #{quantum_layer_forward.1} parent=1 // pred_check
      _
    $region11: #{quantum_layer_forward.1} parent=1 // pred_check_branch
      %30 = sbr.rel (0) target = $region13
    $region12: #{quantum_layer_forward.1} parent=1 // pred_region
      %31 = dma.done [#allocation3], 16
    $region13: #{quantum_layer_forward.1} parent=1 // pred_fallthru
      _
    // Predicated region
    $region14: #{quantum_layer_forward.1} parent=1 // pred_check
      _
    $region15: #{quantum_layer_forward.1} parent=1 // pred_check_branch
      %33 = sbr.rel (0) target = $region17
    $region16: #{quantum_layer_forward.1} parent=1 // pred_region
      %34 = dma.done [#allocation5], 16
    $region17: #{quantum_layer_forward.1} parent=1 // pred_fallthru
      _
    %35 = sfence
    %v36 = vlaneseq
    %v37 = vand.u32 %v36, 127
    %v38 = vand.u32 %v37, 1
    %vm39 = vcmp.eq.s32.totalorder %v38, 0
    %v40 = vand.u32 %v37, 2
    %vm41 = vcmp.eq.s32.totalorder %v40, 0
    %v42 = vand.u32 %v37, 4
    %vm43 = vcmp.eq.s32.totalorder %v42, 0
    %v44 = vand.u32 %v37, 8
    %vm45 = vcmp.eq.s32.totalorder %v44, 0
    %v46 = vand.u32 %v37, 16
    %vm47 = vcmp.eq.s32.totalorder %v46, 0
    %v48 = vand.u32 %v37, 32
    %vm49 = vcmp.eq.s32.totalorder %v48, 0
    %v50 = vand.u32 %v37, 64
    %vm51 = vcmp.eq.s32.totalorder %v50, 0
    %vm52 = vcmp.eq.s32.totalorder %v37, 0
    %v53 = vsel %vm52, 1.0, 0.0
    %s54 = sld [smem:[#allocation2]]
    %s55 = sld [smem:[#allocation4]]
    %56 = vrot.lane.b32.xlu0 %v53, 64
    %v57 = vpop.permute.xlu0 %56
    %v58 = vstv %s54
    %v59 = vmul.f32 %v58, %v53
    %v60 = vsub.f32 0.0, %v57
    %v61 = vsel %vm51, %v60, %v57
    %v62 = vstv %s55
    %v63 = vmul.f32 %v62, %v61
    %v64 = vadd.f32 %v59, %v63
    %s65 = sld [smem:[#allocation2 + $0x1]]
    %s66 = sld [smem:[#allocation4 + $0x1]]
    %67 = vrot.lane.b32.xlu0 %v64, 96
    %v68 = vpop.permute.xlu0 %67
    %69 = vrot.lane.b32.xlu0 %v64, 32
    %v70 = vpop.permute.xlu0 %69
    %v71 = vsel %vm49, %v68, %v70
    %v72 = vstv %s65
    %v73 = vmul.f32 %v72, %v64
    %v74 = vsub.f32 0.0, %v71
    %v75 = vsel %vm49, %v74, %v70
    %v76 = vstv %s66
    %v77 = vmul.f32 %v76, %v75
    %v78 = vadd.f32 %v73, %v77
    %s79 = sld [smem:[#allocation2 + $0x2]]
    %s80 = sld [smem:[#allocation4 + $0x2]]
    %81 = vrot.lane.b32.xlu0 %v78, 112
    %v82 = vpop.permute.xlu0 %81
    %83 = vrot.lane.b32.xlu0 %v78, 16
    %v84 = vpop.permute.xlu0 %83
    %v85 = vsel %vm47, %v82, %v84
    %v86 = vstv %s79
    %v87 = vmul.f32 %v86, %v78
    %v88 = vsub.f32 0.0, %v85
    %v89 = vsel %vm47, %v88, %v84
    %v90 = vstv %s80
    %v91 = vmul.f32 %v90, %v89
    %v92 = vadd.f32 %v87, %v91
    %s93 = sld [smem:[#allocation2 + $0x3]]
    %s94 = sld [smem:[#allocation4 + $0x3]]
    %95 = vrot.lane.b32.xlu0 %v92, 120
    %v96 = vpop.permute.xlu0 %95
    %97 = vrot.lane.b32.xlu0 %v92, 8
    %v98 = vpop.permute.xlu0 %97
    %v99 = vsel %vm45, %v96, %v98
    %v100 = vstv %s93
    %v101 = vmul.f32 %v100, %v92
    %v102 = vsub.f32 0.0, %v99
    %v103 = vsel %vm45, %v102, %v98
    %v104 = vstv %s94
    %v105 = vmul.f32 %v104, %v103
    %v106 = vadd.f32 %v101, %v105
    %s107 = sld [smem:[#allocation2 + $0x4]]
    %s108 = sld [smem:[#allocation4 + $0x4]]
    %109 = vrot.lane.b32.xlu0 %v106, 124
    %v110 = vpop.permute.xlu0 %109
    %111 = vrot.lane.b32.xlu0 %v106, 4
    %v112 = vpop.permute.xlu0 %111
    %v113 = vsel %vm43, %v110, %v112
    %v114 = vstv %s107
    %v115 = vmul.f32 %v114, %v106
    %v116 = vsub.f32 0.0, %v113
    %v117 = vsel %vm43, %v116, %v112
    %v118 = vstv %s108
    %v119 = vmul.f32 %v118, %v117
    %v120 = vadd.f32 %v115, %v119
    %s121 = sld [smem:[#allocation2 + $0x5]]
    %s122 = sld [smem:[#allocation4 + $0x5]]
    %123 = vrot.lane.b32.xlu0 %v120, 126
    %v124 = vpop.permute.xlu0 %123
    %125 = vrot.lane.b32.xlu0 %v120, 2
    %v126 = vpop.permute.xlu0 %125
    %v127 = vsel %vm41, %v124, %v126
    %v128 = vstv %s121
    %v129 = vmul.f32 %v128, %v120
    %v130 = vsub.f32 0.0, %v127
    %v131 = vsel %vm41, %v130, %v126
    %v132 = vstv %s122
    %v133 = vmul.f32 %v132, %v131
    %v134 = vadd.f32 %v129, %v133
    %s135 = sld [smem:[#allocation2 + $0x6]]
    %s136 = sld [smem:[#allocation4 + $0x6]]
    %137 = vrot.lane.b32.xlu0 %v134, 127
    %v138 = vpop.permute.xlu0 %137
    %139 = vrot.lane.b32.xlu0 %v134, 1
    %v140 = vpop.permute.xlu0 %139
    %v141 = vsel %vm39, %v138, %v140
    %v142 = vstv %s135
    %v143 = vmul.f32 %v142, %v134
    %v144 = vsub.f32 0.0, %v141
    %v145 = vsel %vm39, %v144, %v140
    %v146 = vstv %s136
    %v147 = vmul.f32 %v146, %v145
    %v148 = vadd.f32 %v143, %v147
    %s149 = sld [smem:[#allocation2 + $0x7]]
    %s150 = sld [smem:[#allocation4 + $0x7]]
    %151 = vrot.lane.b32.xlu0 %v148, 64
    %v152 = vpop.permute.xlu0 %151
    %v153 = vstv %s149
    %v154 = vmul.f32 %v153, %v148
    %v155 = vsub.f32 0.0, %v152
    %v156 = vsel %vm51, %v155, %v152
    %v157 = vstv %s150
    %v158 = vmul.f32 %v157, %v156
    %v159 = vadd.f32 %v154, %v158
    %s160 = sld [smem:[#allocation2 + $0x8]]
    %s161 = sld [smem:[#allocation4 + $0x8]]
    %162 = vrot.lane.b32.xlu0 %v159, 96
    %v163 = vpop.permute.xlu0 %162
    %164 = vrot.lane.b32.xlu0 %v159, 32
    %v165 = vpop.permute.xlu0 %164
    %v166 = vsel %vm49, %v163, %v165
    %v167 = vstv %s160
    %v168 = vmul.f32 %v167, %v159
    %v169 = vsub.f32 0.0, %v166
    %v170 = vsel %vm49, %v169, %v165
    %v171 = vstv %s161
    %v172 = vmul.f32 %v171, %v170
    %v173 = vadd.f32 %v168, %v172
    %s174 = sld [smem:[#allocation2 + $0x9]]
    %s175 = sld [smem:[#allocation4 + $0x9]]
    %176 = vrot.lane.b32.xlu0 %v173, 112
    %v177 = vpop.permute.xlu0 %176
    %178 = vrot.lane.b32.xlu0 %v173, 16
    %v179 = vpop.permute.xlu0 %178
    %v180 = vsel %vm47, %v177, %v179
    %v181 = vstv %s174
    %v182 = vmul.f32 %v181, %v173
    %v183 = vsub.f32 0.0, %v180
    %v184 = vsel %vm47, %v183, %v179
    %v185 = vstv %s175
    %v186 = vmul.f32 %v185, %v184
    %v187 = vadd.f32 %v182, %v186
    %s188 = sld [smem:[#allocation2 + $0xa]]
    %s189 = sld [smem:[#allocation4 + $0xa]]
    %190 = vrot.lane.b32.xlu0 %v187, 120
    %v191 = vpop.permute.xlu0 %190
    %192 = vrot.lane.b32.xlu0 %v187, 8
    %v193 = vpop.permute.xlu0 %192
    %v194 = vsel %vm45, %v191, %v193
    %v195 = vstv %s188
    %v196 = vmul.f32 %v195, %v187
    %v197 = vsub.f32 0.0, %v194
    %v198 = vsel %vm45, %v197, %v193
    %v199 = vstv %s189
    %v200 = vmul.f32 %v199, %v198
    %v201 = vadd.f32 %v196, %v200
    %s202 = sld [smem:[#allocation2 + $0xb]]
    %s203 = sld [smem:[#allocation4 + $0xb]]
    %204 = vrot.lane.b32.xlu0 %v201, 124
    %v205 = vpop.permute.xlu0 %204
    %206 = vrot.lane.b32.xlu0 %v201, 4
    %v207 = vpop.permute.xlu0 %206
    %v208 = vsel %vm43, %v205, %v207
    %v209 = vstv %s202
    %v210 = vmul.f32 %v209, %v201
    %v211 = vsub.f32 0.0, %v208
    %v212 = vsel %vm43, %v211, %v207
    %v213 = vstv %s203
    %v214 = vmul.f32 %v213, %v212
    %v215 = vadd.f32 %v210, %v214
    %s216 = sld [smem:[#allocation2 + $0xc]]
    %s217 = sld [smem:[#allocation4 + $0xc]]
    %218 = vrot.lane.b32.xlu0 %v215, 126
    %v219 = vpop.permute.xlu0 %218
    %220 = vrot.lane.b32.xlu0 %v215, 2
    %v221 = vpop.permute.xlu0 %220
    %v222 = vsel %vm41, %v219, %v221
    %v223 = vstv %s216
    %v224 = vmul.f32 %v223, %v215
    %v225 = vsub.f32 0.0, %v222
    %v226 = vsel %vm41, %v225, %v221
    %v227 = vstv %s217
    %v228 = vmul.f32 %v227, %v226
    %v229 = vadd.f32 %v224, %v228
    %s230 = sld [smem:[#allocation2 + $0xd]]
    %s231 = sld [smem:[#allocation4 + $0xd]]
    %232 = vrot.lane.b32.xlu0 %v229, 127
    %v233 = vpop.permute.xlu0 %232
    %234 = vrot.lane.b32.xlu0 %v229, 1
    %v235 = vpop.permute.xlu0 %234
    %v236 = vsel %vm39, %v233, %v235
    %v237 = vstv %s230
    %v238 = vmul.f32 %v237, %v229
    %v239 = vsub.f32 0.0, %v236
    %v240 = vsel %vm39, %v239, %v235
    %v241 = vstv %s231
    %v242 = vmul.f32 %v241, %v240
    %v243 = vadd.f32 %v238, %v242
    %244 = vrot.lane.b32.xlu0 %v243, 96
    %v245 = vpop.permute.xlu0 %244
    %246 = vrot.lane.b32.xlu0 %v243, 32
    %v247 = vpop.permute.xlu0 %246
    %v248 = vsel %vm49, %v245, %v247
    %v249 = vsel %vm51, %v243, %v248
    %250 = vrot.lane.b32.xlu0 %v249, 112
    %v251 = vpop.permute.xlu0 %250
    %252 = vrot.lane.b32.xlu0 %v249, 16
    %v253 = vpop.permute.xlu0 %252
    %v254 = vsel %vm47, %v251, %v253
    %v255 = vsel %vm49, %v249, %v254
    %256 = vrot.lane.b32.xlu0 %v255, 120
    %v257 = vpop.permute.xlu0 %256
    %258 = vrot.lane.b32.xlu0 %v255, 8
    %v259 = vpop.permute.xlu0 %258
    %v260 = vsel %vm45, %v257, %v259
    %v261 = vsel %vm47, %v255, %v260
    %262 = vrot.lane.b32.xlu0 %v261, 124
    %v263 = vpop.permute.xlu0 %262
    %264 = vrot.lane.b32.xlu0 %v261, 4
    %v265 = vpop.permute.xlu0 %264
    %v266 = vsel %vm43, %v263, %v265
    %v267 = vsel %vm45, %v261, %v266
    %268 = vrot.lane.b32.xlu0 %v267, 126
    %v269 = vpop.permute.xlu0 %268
    %270 = vrot.lane.b32.xlu0 %v267, 2
    %v271 = vpop.permute.xlu0 %270
    %v272 = vsel %vm41, %v269, %v271
    %v273 = vsel %vm43, %v267, %v272
    %274 = vrot.lane.b32.xlu0 %v273, 127
    %v275 = vpop.permute.xlu0 %274
    %276 = vrot.lane.b32.xlu0 %v273, 1
    %v277 = vpop.permute.xlu0 %276
    %v278 = vsel %vm39, %v275, %v277
    %v279 = vsel %vm41, %v273, %v278
    %280 = vrot.lane.b32.xlu0 %v279, 64
    %v281 = vpop.permute.xlu0 %280
    %v282 = vsel %vm39, %v279, %v281
    %s283 = sld [smem:[#allocation2 + $0xe]]
    %s284 = sld [smem:[#allocation4 + $0xe]]
    %285 = vrot.lane.b32.xlu0 %v282, 64
    %v286 = vpop.permute.xlu0 %285
    %v287 = vstv %s283
    %v288 = vmul.f32 %v287, %v282
    %v289 = vsub.f32 0.0, %v286
    %v290 = vsel %vm51, %v289, %v286
    %v291 = vstv %s284
    %v292 = vmul.f32 %v291, %v290
    %v293 = vadd.f32 %v288, %v292
    %s294 = sld [smem:[#allocation2 + $0xf]]
    %s295 = sld [smem:[#allocation4 + $0xf]]
    %296 = vrot.lane.b32.xlu0 %v293, 96
    %v297 = vpop.permute.xlu0 %296
    %298 = vrot.lane.b32.xlu0 %v293, 32
    %v299 = vpop.permute.xlu0 %298
    %v300 = vsel %vm49, %v297, %v299
    %v301 = vstv %s294
    %v302 = vmul.f32 %v301, %v293
    %v303 = vsub.f32 0.0, %v300
    %v304 = vsel %vm49, %v303, %v299
    %v305 = vstv %s295
    %v306 = vmul.f32 %v305, %v304
    %v307 = vadd.f32 %v302, %v306
    %s308 = sld [smem:[#allocation2 + $0x10]]
    %s309 = sld [smem:[#allocation4 + $0x10]]
    %310 = vrot.lane.b32.xlu0 %v307, 112
    %v311 = vpop.permute.xlu0 %310
    %312 = vrot.lane.b32.xlu0 %v307, 16
    %v313 = vpop.permute.xlu0 %312
    %v314 = vsel %vm47, %v311, %v313
    %v315 = vstv %s308
    %v316 = vmul.f32 %v315, %v307
    %v317 = vsub.f32 0.0, %v314
    %v318 = vsel %vm47, %v317, %v313
    %v319 = vstv %s309
    %v320 = vmul.f32 %v319, %v318
    %v321 = vadd.f32 %v316, %v320
    %s322 = sld [smem:[#allocation2 + $0x11]]
    %s323 = sld [smem:[#allocation4 + $0x11]]
    %324 = vrot.lane.b32.xlu0 %v321, 120
    %v325 = vpop.permute.xlu0 %324
    %326 = vrot.lane.b32.xlu0 %v321, 8
    %v327 = vpop.permute.xlu0 %326
    %v328 = vsel %vm45, %v325, %v327
    %v329 = vstv %s322
    %v330 = vmul.f32 %v329, %v321
    %v331 = vsub.f32 0.0, %v328
    %v332 = vsel %vm45, %v331, %v327
    %v333 = vstv %s323
    %v334 = vmul.f32 %v333, %v332
    %v335 = vadd.f32 %v330, %v334
    %s336 = sld [smem:[#allocation2 + $0x12]]
    %s337 = sld [smem:[#allocation4 + $0x12]]
    %338 = vrot.lane.b32.xlu0 %v335, 124
    %v339 = vpop.permute.xlu0 %338
    %340 = vrot.lane.b32.xlu0 %v335, 4
    %v341 = vpop.permute.xlu0 %340
    %v342 = vsel %vm43, %v339, %v341
    %v343 = vstv %s336
    %v344 = vmul.f32 %v343, %v335
    %v345 = vsub.f32 0.0, %v342
    %v346 = vsel %vm43, %v345, %v341
    %v347 = vstv %s337
    %v348 = vmul.f32 %v347, %v346
    %v349 = vadd.f32 %v344, %v348
    %s350 = sld [smem:[#allocation2 + $0x13]]
    %s351 = sld [smem:[#allocation4 + $0x13]]
    %352 = vrot.lane.b32.xlu0 %v349, 126
    %v353 = vpop.permute.xlu0 %352
    %354 = vrot.lane.b32.xlu0 %v349, 2
    %v355 = vpop.permute.xlu0 %354
    %v356 = vsel %vm41, %v353, %v355
    %v357 = vstv %s350
    %v358 = vmul.f32 %v357, %v349
    %v359 = vsub.f32 0.0, %v356
    %v360 = vsel %vm41, %v359, %v355
    %v361 = vstv %s351
    %v362 = vmul.f32 %v361, %v360
    %v363 = vadd.f32 %v358, %v362
    %s364 = sld [smem:[#allocation2 + $0x14]]
    %s365 = sld [smem:[#allocation4 + $0x14]]
    %366 = vrot.lane.b32.xlu0 %v363, 127
    %v367 = vpop.permute.xlu0 %366
    %368 = vrot.lane.b32.xlu0 %v363, 1
    %v369 = vpop.permute.xlu0 %368
    %v370 = vsel %vm39, %v367, %v369
    %v371 = vstv %s364
    %v372 = vmul.f32 %v371, %v363
    %v373 = vsub.f32 0.0, %v370
    %v374 = vsel %vm39, %v373, %v369
    %v375 = vstv %s365
    %v376 = vmul.f32 %v375, %v374
    %v377 = vadd.f32 %v372, %v376
    %378 = vrot.lane.b32.xlu0 %v377, 96
    %v379 = vpop.permute.xlu0 %378
    %380 = vrot.lane.b32.xlu0 %v377, 32
    %v381 = vpop.permute.xlu0 %380
    %v382 = vsel %vm49, %v379, %v381
    %v383 = vsel %vm51, %v377, %v382
    %384 = vrot.lane.b32.xlu0 %v383, 112
    %v385 = vpop.permute.xlu0 %384
    %386 = vrot.lane.b32.xlu0 %v383, 16
    %v387 = vpop.permute.xlu0 %386
    %v388 = vsel %vm47, %v385, %v387
    %v389 = vsel %vm49, %v383, %v388
    %390 = vrot.lane.b32.xlu0 %v389, 120
    %v391 = vpop.permute.xlu0 %390
    %392 = vrot.lane.b32.xlu0 %v389, 8
    %v393 = vpop.permute.xlu0 %392
    %v394 = vsel %vm45, %v391, %v393
    %v395 = vsel %vm47, %v389, %v394
    %396 = vrot.lane.b32.xlu0 %v395, 124
    %v397 = vpop.permute.xlu0 %396
    %398 = vrot.lane.b32.xlu0 %v395, 4
    %v399 = vpop.permute.xlu0 %398
    %v400 = vsel %vm43, %v397, %v399
    %v401 = vsel %vm45, %v395, %v400
    %402 = vrot.lane.b32.xlu0 %v401, 126
    %v403 = vpop.permute.xlu0 %402
    %404 = vrot.lane.b32.xlu0 %v401, 2
    %v405 = vpop.permute.xlu0 %404
    %v406 = vsel %vm41, %v403, %v405
    %v407 = vsel %vm43, %v401, %v406
    %408 = vrot.lane.b32.xlu0 %v407, 127
    %v409 = vpop.permute.xlu0 %408
    %410 = vrot.lane.b32.xlu0 %v407, 1
    %v411 = vpop.permute.xlu0 %410
    %v412 = vsel %vm39, %v409, %v411
    %v413 = vsel %vm41, %v407, %v412
    %414 = vrot.lane.b32.xlu0 %v413, 64
    %v415 = vpop.permute.xlu0 %414
    %v416 = vsel %vm39, %v413, %v415
    %v417 = vmul.f32 %v416, %v416
    %418 = vst [vmem:[%s2] sm:$0xff] %v417
    // Predicated region
    $region18: #{quantum_layer_forward.1} parent=1 // pred_check
      _
    $region19: #{quantum_layer_forward.1} parent=1 // pred_check_branch
      %420 = sbr.rel (0) target = $region21
    $region20: #{quantum_layer_forward.1} parent=1 // pred_region
      _
    $region21: #{quantum_layer_forward.1} parent=1 // pred_fallthru
      _
    // Predicated region
    $region22: #{quantum_layer_forward.1} parent=1 // pred_check
      _
    $region23: #{quantum_layer_forward.1} parent=1 // pred_check_branch
      %422 = sbr.rel (0) target = $region25
    $region24: #{quantum_layer_forward.1} parent=1 // pred_region
      _
    $region25: #{quantum_layer_forward.1} parent=1 // pred_fallthru
      _
    %423 = vsyncpa [#allocation3], 1
    %424 = vsyncpa [#allocation5], 1

</llo_original>
